<compile_context>
chip_gen: v7x
topology: tpu7x:2x2x1
jax: 0.10.0
libtpu: 0.0.40
codegen_flags: <defaults>
</compile_context>

<pallas_src>
import jax
import jax.numpy as jnp
from jax.experimental import pallas as pl
from jax.experimental.pallas import tpu as pltpu

EMBED_DIM = 128
CONV_SIZE = 4
BITRATE_LEVELS = 6
STATE_FEATS = 36          # 6 x 6 flattened state
K_IN = STATE_FEATS + 1    # + ones column carrying the fused bias row
NEG_SLOPE = 0.01          # torch.nn.LeakyReLU default

# Per-branch output widths (all multiples of 128 -> lane-dense stores)
_L_OUT3 = 6 - CONV_SIZE + 1          # 3
_L_OUT5 = 6 - BITRATE_LEVELS + 1     # 1
_WIDTHS = (EMBED_DIM,                # fc1
           EMBED_DIM,                # fc2
           EMBED_DIM * _L_OUT3,      # conv3 flattened (384)
           EMBED_DIM * _L_OUT3,      # conv4 flattened (384)
           EMBED_DIM * _L_OUT5,      # conv5 flattened (128)
           EMBED_DIM)                # fc6
_OFFS = tuple(sum(_WIDTHS[:i]) for i in range(len(_WIDTHS) + 1))
TOTAL_OUT = _OFFS[-1]                # 1280


def _leaky(v):
    # 2 VALU ops (mul + max); valid for 0 < NEG_SLOPE < 1.
    return jnp.maximum(v, NEG_SLOPE * v)


# ---------------------------------------------------------------------------
# Kernel: one fused-weight matmul per branch, six lane-dense output stores.
# ---------------------------------------------------------------------------
def encoder_kernel(x_ref, w_ref, *out_refs):
    x = x_ref[...]                                     # (tile, 37) f32
    for idx, o_ref in enumerate(out_refs):
        w = w_ref[:, _OFFS[idx]:_OFFS[idx + 1]]        # lane-aligned static slice
        y = jnp.dot(x, w, preferred_element_type=jnp.float32)
        o_ref[...] = _leaky(y).astype(o_ref.dtype)


# ---------------------------------------------------------------------------
# Host-side parameter packing
# ---------------------------------------------------------------------------
def conv1d_as_matmul(w_conv, b_conv, l_in):
    """w_conv: (D, K) (PyTorch Conv1d weight (D,1,K) squeezed), b_conv: (D,).
    Returns W: (l_in, D*L_out), b: (1, D*L_out) so that
    x(N, l_in) @ W + b == Flatten(Conv1d(x)) (PyTorch column order d*L_out+t)."""
    d, k = w_conv.shape
    l_out = l_in - k + 1
    w = jnp.zeros((l_in, d, l_out), dtype=w_conv.dtype)
    for t in range(l_out):
        w = w.at[t:t + k, :, t].set(w_conv.T)
    w = w.reshape(l_in, d * l_out)
    b = jnp.tile(b_conv[:, None], (1, l_out)).reshape(1, d * l_out)
    return w, b


def pack_params(raw):
    """Build the fused (37, 1280) weight (last row = bias) from raw params."""
    w3, b3 = conv1d_as_matmul(raw["w3c"], raw["b3c"], 6)
    w4, b4 = conv1d_as_matmul(raw["w4c"], raw["b4c"], 6)
    w5, b5 = conv1d_as_matmul(raw["w5c"], raw["b5c"], 6)

    W = jnp.zeros((K_IN, TOTAL_OUT), jnp.float32)
    # column layout of flattened (6,6) state: col = row*6 + c
    W = W.at[5, _OFFS[0]:_OFFS[1]].set(raw["w1"][0])       # state[:,0,-1]
    W = W.at[11, _OFFS[1]:_OFFS[2]].set(raw["w2"][0])      # state[:,1,-1]
    W = W.at[12:18, _OFFS[2]:_OFFS[3]].set(w3)             # state[:,2,:]
    W = W.at[18:24, _OFFS[3]:_OFFS[4]].set(w4)             # state[:,3,:]
    W = W.at[24:30, _OFFS[4]:_OFFS[5]].set(w5)             # state[:,4,:6]
    W = W.at[35, _OFFS[5]:_OFFS[6]].set(raw["w6"][0])      # state[:,5,-1]

    bias = jnp.concatenate(
        [raw["b1"], raw["b2"], b3, b4, b5, raw["b6"]], axis=1)   # (1, 1280)
    W = W.at[STATE_FEATS, :].set(bias[0])                         # bias row
    return {"W": W}


def init_params(key):
    d = EMBED_DIM
    keys = jax.random.split(key, 12)
    raw = {
        "w1": 0.1 * jax.random.normal(keys[0], (1, d), jnp.float32),
        "b1": 0.1 * jax.random.normal(keys[1], (1, d), jnp.float32),
        "w2": 0.1 * jax.random.normal(keys[2], (1, d), jnp.float32),
        "b2": 0.1 * jax.random.normal(keys[3], (1, d), jnp.float32),
        "w3c": 0.1 * jax.random.normal(keys[4], (d, CONV_SIZE), jnp.float32),
        "b3c": 0.1 * jax.random.normal(keys[5], (d,), jnp.float32),
        "w4c": 0.1 * jax.random.normal(keys[6], (d, CONV_SIZE), jnp.float32),
        "b4c": 0.1 * jax.random.normal(keys[7], (d,), jnp.float32),
        "w5c": 0.1 * jax.random.normal(keys[8], (d, BITRATE_LEVELS), jnp.float32),
        "b5c": 0.1 * jax.random.normal(keys[9], (d,), jnp.float32),
        "w6": 0.1 * jax.random.normal(keys[10], (1, d), jnp.float32),
        "b6": 0.1 * jax.random.normal(keys[11], (1, d), jnp.float32),
    }
    return pack_params(raw), raw


# ---------------------------------------------------------------------------
# Forward pass
# ---------------------------------------------------------------------------
def encoder_forward(state, params, *, tile_rows=1024, out_dtype=jnp.float32):
    b, l = state.shape[0], state.shape[1]
    n = b * l
    x = state.reshape(n, STATE_FEATS).astype(jnp.float32)
    # Ones column feeds the fused bias row of W (bias folded into the matmul).
    x = jnp.concatenate([x, jnp.ones((n, 1), jnp.float32)], axis=1)  # (n, 37)

    # Clamp tile to the (8-aligned) problem size; keep it a multiple of 8.
    n_aligned = ((n + 7) // 8) * 8
    tile = max(8, min((tile_rows // 8) * 8, n_aligned))
    grid = pl.cdiv(n, tile)
    n_pad = grid * tile
    if n_pad != n:
        x = jnp.pad(x, ((0, n_pad - n), (0, 0)))   # padded rows -> zeros -> trimmed

    # Scoped-VMEM limit derived from the actual block sizes (+ slack),
    # clamped to a safe floor so the Mosaic scratch always fits.
    x_block_bytes = tile * 128 * 4               # 37 lanes pad to 128
    out_block_bytes = tile * TOTAL_OUT * 4
    w_bytes = 40 * TOTAL_OUT * 4                 # 37 sublanes pad to 40
    vmem_limit = 2 * (x_block_bytes + out_block_bytes) + 2 * w_bytes + (2 << 20)
    vmem_limit = int(min(max(vmem_limit, 32 << 20), 100 << 20))

    out_shapes = tuple(jax.ShapeDtypeStruct((n_pad, w), out_dtype)
                       for w in _WIDTHS)
    out_specs = [pl.BlockSpec((tile, w), lambda i: (i, 0)) for w in _WIDTHS]

    outs = pl.pallas_call(
        encoder_kernel,
        out_shape=out_shapes,
        grid_spec=pltpu.PrefetchScalarGridSpec(
            num_scalar_prefetch=0,
            grid=(grid,),
            in_specs=[
                pl.BlockSpec((tile, K_IN), lambda i: (i, 0)),
                pl.BlockSpec((K_IN, TOTAL_OUT), lambda i: (0, 0)),
            ],
            out_specs=out_specs),
        compiler_params=pltpu.CompilerParams(
            dimension_semantics=("parallel",),
            vmem_limit_bytes=vmem_limit),
    )(x, params["W"])

    return tuple(o[:n].reshape(b, l, -1) for o in outs)


# ---------------------------------------------------------------------------
# Pure-JAX reference of the PyTorch forward (for correctness checking)
# ---------------------------------------------------------------------------
def reference_forward(state, raw):
    b, l = state.shape[0], state.shape[1]
    s = state.reshape(b * l, 6, 6).astype(jnp.float32)
    lb = s[:, 0:1, -1]
    buf = s[:, 1:2, -1]
    thr = s[:, 2, :]
    dlt = s[:, 3, :]
    ncs = s[:, 4, :BITRATE_LEVELS]
    rem = s[:, 5:6, -1]

    def leaky(v):
        return jnp.where(v >= 0, v, NEG_SLOPE * v)

    def conv_flat(x, w, bias):          # x (N,6), w (D,K), bias (D,)
        d_, k_ = w.shape
        l_out = 6 - k_ + 1
        cols = [x[:, t:t + k_] @ w.T + bias for t in range(l_out)]
        out = jnp.stack(cols, axis=-1)  # (N, D, L_out) — torch conv layout
        return out.reshape(x.shape[0], d_ * l_out)

    f1 = leaky(lb @ raw["w1"] + raw["b1"])
    f2 = leaky(buf @ raw["w2"] + raw["b2"])
    f3 = leaky(conv_flat(thr, raw["w3c"], raw["b3c"]))
    f4 = leaky(conv_flat(dlt, raw["w4c"], raw["b4c"]))
    f5 = leaky(conv_flat(ncs, raw["w5c"], raw["b5c"]))
    f6 = leaky(rem @ raw["w6"] + raw["b6"])
    return tuple(f.reshape(b, l, -1) for f in (f1, f2, f3, f4, f5, f6))


if __name__ == "__main__":
    key = jax.random.PRNGKey(0)
    k_state, k_params = jax.random.split(key)

    B, L = 2, 8
    state = jax.random.uniform(k_state, (B, L, 6, 6), dtype=jnp.float32,
                               minval=-1.0, maxval=1.0)

    params, raw = init_params(k_params)

    feats = encoder_forward(state, params)
    feats = jax.block_until_ready(feats)

    ref = reference_forward(state, raw)
    for got, want in zip(feats, ref):
        assert got.shape == want.shape, (got.shape, want.shape)
        assert jnp.allclose(got, want, atol=1e-5, rtol=1e-5), \
            float(jnp.max(jnp.abs(got - want)))

    print("KERNEL_OK")
</pallas_src>

<mosaic_0001>
module attributes {stable_mosaic.version = 11 : i64} {
  func.func @encoder_kernel(%arg0: i32, %arg1: memref<16x37xf32, #tpu.memory_space<vmem>>, %arg2: memref<37x1280xf32, #tpu.memory_space<vmem>>, %arg3: memref<16x128xf32, #tpu.memory_space<vmem>>, %arg4: memref<16x128xf32, #tpu.memory_space<vmem>>, %arg5: memref<16x384xf32, #tpu.memory_space<vmem>>, %arg6: memref<16x384xf32, #tpu.memory_space<vmem>>, %arg7: memref<16x128xf32, #tpu.memory_space<vmem>>, %arg8: memref<16x128xf32, #tpu.memory_space<vmem>>) attributes {dimension_semantics = [#tpu.dimension_semantics<parallel>], iteration_bounds = array<i64: 1>, scalar_prefetch = 0 : i64, scratch_operands = 0 : i64, tpu.core_type = #tpu.core_type<tc>, window_params = [{transform_indices = @transform_0, window_bounds = array<i64: 16, 37>}, {pipeline_mode = #tpu.pipeline_mode<synchronous>, transform_indices = @transform_1, window_bounds = array<i64: 37, 1280>}, {transform_indices = @transform_2, window_bounds = array<i64: 16, 128>}, {transform_indices = @transform_3, window_bounds = array<i64: 16, 128>}, {transform_indices = @transform_4, window_bounds = array<i64: 16, 384>}, {transform_indices = @transform_5, window_bounds = array<i64: 16, 384>}, {transform_indices = @transform_6, window_bounds = array<i64: 16, 128>}, {transform_indices = @transform_7, window_bounds = array<i64: 16, 128>}]} {
    %c0 = arith.constant 0 : index
    %c0_0 = arith.constant 0 : index
    %0 = vector.load %arg1[%c0, %c0_0] : memref<16x37xf32, #tpu.memory_space<vmem>>, vector<16x37xf32>
    %c0_1 = arith.constant 0 : index
    %c0_2 = arith.constant 0 : index
    %1 = vector.load %arg2[%c0_1, %c0_2] : memref<37x1280xf32, #tpu.memory_space<vmem>>, vector<37x128xf32>
    %cst = arith.constant dense<0.000000e+00> : vector<16x128xf32>
    %2 = tpu.matmul %0, %1, %cst {dimension_numbers = #tpu.dot_dimension_numbers<[1], [0], [0], [1], [0, 0, 1, 1], [], []>} : vector<16x37xf32>, vector<37x128xf32>, vector<16x128xf32> -> vector<16x128xf32>
    %cst_3 = arith.constant 0.00999999977 : f32
    %3 = vector.broadcast %cst_3 : f32 to vector<16x128xf32>
    %4 = arith.mulf %3, %2 : vector<16x128xf32>
    %5 = arith.maximumf %2, %4 : vector<16x128xf32>
    %c0_4 = arith.constant 0 : index
    %c0_5 = arith.constant 0 : index
    %6 = vector.load %arg3[%c0_4, %c0_5] : memref<16x128xf32, #tpu.memory_space<vmem>>, vector<16x128xf32>
    tpu.vector_store %arg3[%c0_4, %c0_5], %5 {strides = array<i32>} : memref<16x128xf32, #tpu.memory_space<vmem>>, vector<16x128xf32>,
    %c0_6 = arith.constant 0 : index
    %c128 = arith.constant 128 : index
    %7 = vector.load %arg2[%c0_6, %c128] : memref<37x1280xf32, #tpu.memory_space<vmem>>, vector<37x128xf32>
    %cst_7 = arith.constant dense<0.000000e+00> : vector<16x128xf32>
    %8 = tpu.matmul %0, %7, %cst_7 {dimension_numbers = #tpu.dot_dimension_numbers<[1], [0], [0], [1], [0, 0, 1, 1], [], []>} : vector<16x37xf32>, vector<37x128xf32>, vector<16x128xf32> -> vector<16x128xf32>
    %cst_8 = arith.constant 0.00999999977 : f32
    %9 = vector.broadcast %cst_8 : f32 to vector<16x128xf32>
    %10 = arith.mulf %9, %8 : vector<16x128xf32>
    %11 = arith.maximumf %8, %10 : vector<16x128xf32>
    %c0_9 = arith.constant 0 : index
    %c0_10 = arith.constant 0 : index
    %12 = vector.load %arg4[%c0_9, %c0_10] : memref<16x128xf32, #tpu.memory_space<vmem>>, vector<16x128xf32>
    tpu.vector_store %arg4[%c0_9, %c0_10], %11 {strides = array<i32>} : memref<16x128xf32, #tpu.memory_space<vmem>>, vector<16x128xf32>,
    %c0_11 = arith.constant 0 : index
    %c256 = arith.constant 256 : index
    %13 = vector.load %arg2[%c0_11, %c256] : memref<37x1280xf32, #tpu.memory_space<vmem>>, vector<37x384xf32>
    %cst_12 = arith.constant dense<0.000000e+00> : vector<16x384xf32>
    %14 = tpu.matmul %0, %13, %cst_12 {dimension_numbers = #tpu.dot_dimension_numbers<[1], [0], [0], [1], [0, 0, 1, 1], [], []>} : vector<16x37xf32>, vector<37x384xf32>, vector<16x384xf32> -> vector<16x384xf32>
    %cst_13 = arith.constant 0.00999999977 : f32
    %15 = vector.broadcast %cst_13 : f32 to vector<16x384xf32>
    %16 = arith.mulf %15, %14 : vector<16x384xf32>
    %17 = arith.maximumf %14, %16 : vector<16x384xf32>
    %c0_14 = arith.constant 0 : index
    %c0_15 = arith.constant 0 : index
    %18 = vector.load %arg5[%c0_14, %c0_15] : memref<16x384xf32, #tpu.memory_space<vmem>>, vector<16x384xf32>
    tpu.vector_store %arg5[%c0_14, %c0_15], %17 {strides = array<i32>} : memref<16x384xf32, #tpu.memory_space<vmem>>, vector<16x384xf32>,
    %c0_16 = arith.constant 0 : index
    %c640 = arith.constant 640 : index
    %19 = vector.load %arg2[%c0_16, %c640] : memref<37x1280xf32, #tpu.memory_space<vmem>>, vector<37x384xf32>
    %cst_17 = arith.constant dense<0.000000e+00> : vector<16x384xf32>
    %20 = tpu.matmul %0, %19, %cst_17 {dimension_numbers = #tpu.dot_dimension_numbers<[1], [0], [0], [1], [0, 0, 1, 1], [], []>} : vector<16x37xf32>, vector<37x384xf32>, vector<16x384xf32> -> vector<16x384xf32>
    %cst_18 = arith.constant 0.00999999977 : f32
    %21 = vector.broadcast %cst_18 : f32 to vector<16x384xf32>
    %22 = arith.mulf %21, %20 : vector<16x384xf32>
    %23 = arith.maximumf %20, %22 : vector<16x384xf32>
    %c0_19 = arith.constant 0 : index
    %c0_20 = arith.constant 0 : index
    %24 = vector.load %arg6[%c0_19, %c0_20] : memref<16x384xf32, #tpu.memory_space<vmem>>, vector<16x384xf32>
    tpu.vector_store %arg6[%c0_19, %c0_20], %23 {strides = array<i32>} : memref<16x384xf32, #tpu.memory_space<vmem>>, vector<16x384xf32>,
    %c0_21 = arith.constant 0 : index
    %c1024 = arith.constant 1024 : index
    %25 = vector.load %arg2[%c0_21, %c1024] : memref<37x1280xf32, #tpu.memory_space<vmem>>, vector<37x128xf32>
    %cst_22 = arith.constant dense<0.000000e+00> : vector<16x128xf32>
    %26 = tpu.matmul %0, %25, %cst_22 {dimension_numbers = #tpu.dot_dimension_numbers<[1], [0], [0], [1], [0, 0, 1, 1], [], []>} : vector<16x37xf32>, vector<37x128xf32>, vector<16x128xf32> -> vector<16x128xf32>
    %cst_23 = arith.constant 0.00999999977 : f32
    %27 = vector.broadcast %cst_23 : f32 to vector<16x128xf32>
    %28 = arith.mulf %27, %26 : vector<16x128xf32>
    %29 = arith.maximumf %26, %28 : vector<16x128xf32>
    %c0_24 = arith.constant 0 : index
    %c0_25 = arith.constant 0 : index
    %30 = vector.load %arg7[%c0_24, %c0_25] : memref<16x128xf32, #tpu.memory_space<vmem>>, vector<16x128xf32>
    tpu.vector_store %arg7[%c0_24, %c0_25], %29 {strides = array<i32>} : memref<16x128xf32, #tpu.memory_space<vmem>>, vector<16x128xf32>,
    %c0_26 = arith.constant 0 : index
    %c1152 = arith.constant 1152 : index
    %31 = vector.load %arg2[%c0_26, %c1152] : memref<37x1280xf32, #tpu.memory_space<vmem>>, vector<37x128xf32>
    %cst_27 = arith.constant dense<0.000000e+00> : vector<16x128xf32>
    %32 = tpu.matmul %0, %31, %cst_27 {dimension_numbers = #tpu.dot_dimension_numbers<[1], [0], [0], [1], [0, 0, 1, 1], [], []>} : vector<16x37xf32>, vector<37x128xf32>, vector<16x128xf32> -> vector<16x128xf32>
    %cst_28 = arith.constant 0.00999999977 : f32
    %33 = vector.broadcast %cst_28 : f32 to vector<16x128xf32>
    %34 = arith.mulf %33, %32 : vector<16x128xf32>
    %35 = arith.maximumf %32, %34 : vector<16x128xf32>
    %c0_29 = arith.constant 0 : index
    %c0_30 = arith.constant 0 : index
    %36 = vector.load %arg8[%c0_29, %c0_30] : memref<16x128xf32, #tpu.memory_space<vmem>>, vector<16x128xf32>
    tpu.vector_store %arg8[%c0_29, %c0_30], %35 {strides = array<i32>} : memref<16x128xf32, #tpu.memory_space<vmem>>, vector<16x128xf32>,
    return
  }
  func.func @transform_0(%arg0: i32) -> (i32, i32) {
    %c0_i32 = arith.constant 0 : i32
    %c0_i32_0 = arith.constant 0 : i32
    return %arg0, %c0_i32 : i32, i32
  }
  func.func @transform_1(%arg0: i32) -> (i32, i32) {
    %c0_i32 = arith.constant 0 : i32
    %c0_i32_0 = arith.constant 0 : i32
    %c0_i32_1 = arith.constant 0 : i32
    return %c0_i32, %c0_i32_0 : i32, i32
  }
  func.func @transform_2(%arg0: i32) -> (i32, i32) {
    %c0_i32 = arith.constant 0 : i32
    %c0_i32_0 = arith.constant 0 : i32
    return %arg0, %c0_i32 : i32, i32
  }
  func.func @transform_3(%arg0: i32) -> (i32, i32) {
    %c0_i32 = arith.constant 0 : i32
    %c0_i32_0 = arith.constant 0 : i32
    return %arg0, %c0_i32 : i32, i32
  }
  func.func @transform_4(%arg0: i32) -> (i32, i32) {
    %c0_i32 = arith.constant 0 : i32
    %c0_i32_0 = arith.constant 0 : i32
    return %arg0, %c0_i32 : i32, i32
  }
  func.func @transform_5(%arg0: i32) -> (i32, i32) {
    %c0_i32 = arith.constant 0 : i32
    %c0_i32_0 = arith.constant 0 : i32
    return %arg0, %c0_i32 : i32, i32
  }
  func.func @transform_6(%arg0: i32) -> (i32, i32) {
    %c0_i32 = arith.constant 0 : i32
    %c0_i32_0 = arith.constant 0 : i32
    return %arg0, %c0_i32 : i32, i32
  }
  func.func @transform_7(%arg0: i32) -> (i32, i32) {
    %c0_i32 = arith.constant 0 : i32
    %c0_i32_0 = arith.constant 0 : i32
    return %arg0, %c0_i32 : i32, i32
  }
}

</mosaic_0001>

<llo_original>
// kernel: tpu_custom_call.1
$region0: #{tpu_custom_call.1}
  #allocation0 [shape = 'u32[]', space=smem, size = 0x4, offset = 0x4, fixed_abs, tag = 'smem constant byte address 0x4 - core index']
  #allocation1 [shape = 'u32[144,128]{1,0:T(1,128)}', space=vmem, size = 0x12000, scoped, tag = 'internal scratch']
  %s0 = inlined_call_operand.hbm [shape: f32[16,37], index: 0, kind: input, shape index: {}]
  %s1 = inlined_call_operand.hbm [shape: f32[37,1280], index: 1, kind: input, shape index: {}]
  %s2 = inlined_call_operand.hbm [shape: f32[16,128], index: 2, kind: output, shape index: {0}]
  %s3 = inlined_call_operand.hbm [shape: f32[16,128], index: 3, kind: output, shape index: {1}]
  %s4 = inlined_call_operand.hbm [shape: f32[16,384], index: 4, kind: output, shape index: {2}]
  %s5 = inlined_call_operand.hbm [shape: f32[16,384], index: 5, kind: output, shape index: {3}]
  %s6 = inlined_call_operand.hbm [shape: f32[16,128], index: 6, kind: output, shape index: {4}]
  %s7 = inlined_call_operand.hbm [shape: f32[16,128], index: 7, kind: output, shape index: {5}]
  %8 = xla_tuple %s2, %s3, %s4, %s5, %s6, %s7
  %s9 = sld [smem:[#allocation0]]
  $region66: #{tpu_custom_call.1} parent=0
    _
  %s11 = ssub.s32 1, %s9
  %s12 = scalar_select 0, %s11, %s9
  $region1: #{tpu_custom_call.1} parent=0
    #allocation2 [shape = 'u8[8192]{0}', space=vmem, size = 0x2000, scoped, tag = 'input window, operand 0, single buffered']
    #allocation3 [shape = 's32[1]{0}', space=sflag, size = 0x4, scoped, tag = 'scoped memory for tpu_custom_call.1']
    #allocation4 [shape = 's32[1]{0}', space=sflag, size = 0x4, scoped, tag = 'scoped memory for tpu_custom_call.1']
    #allocation5 [shape = 'u8[204800]{0}', space=vmem, size = 0x32000, scoped, tag = 'input window, operand 1, single buffered']
    #allocation6 [shape = 's32[1]{0}', space=sflag, size = 0x4, scoped, tag = 'scoped memory for tpu_custom_call.1']
    #allocation7 [shape = 'u8[8192]{0}', space=vmem, size = 0x2000, scoped, tag = 'output window, operand 0, single buffered']
    #allocation8 [shape = 'u8[8192]{0}', space=vmem, size = 0x2000, scoped, tag = 'output window, operand 1, single buffered']
    #allocation9 [shape = 's32[1]{0}', space=sflag, size = 0x4, scoped, tag = 'scoped memory for tpu_custom_call.1']
    #allocation10 [shape = 'u8[24576]{0}', space=vmem, size = 0x6000, scoped, tag = 'output window, operand 2, single buffered']
    #allocation11 [shape = 'u8[24576]{0}', space=vmem, size = 0x6000, scoped, tag = 'output window, operand 3, single buffered']
    #allocation12 [shape = 's32[1]{0}', space=sflag, size = 0x4, scoped, tag = 'scoped memory for tpu_custom_call.1']
    #allocation13 [shape = 'u8[8192]{0}', space=vmem, size = 0x2000, scoped, tag = 'output window, operand 4, single buffered']
    #allocation14 [shape = 'u8[8192]{0}', space=vmem, size = 0x2000, scoped, tag = 'output window, operand 5, single buffered']
    #allocation15 [shape = 's32[1]{0}', space=sflag, size = 0x4, scoped, tag = 'scoped memory for tpu_custom_call.1']
    %13 = vsyncpa [#allocation3], 0
    %14 = vsyncpa [#allocation6], 0
    %15 = vsyncpa [#allocation4], 0
    %16 = vsyncpa [#allocation9], 0
    %17 = vsyncpa [#allocation12], 0
    %18 = vsyncpa [#allocation15], 0
    // Predicated region
    $region2: #{tpu_custom_call.1} parent=1 // pred_check
      _
    $region3: #{tpu_custom_call.1} parent=1 // pred_check_branch
      %20 = sbr.rel (0) target = $region5
    $region4: #{tpu_custom_call.1} parent=1 // pred_region
      %s22 = ssub.s32 256, 256
      %23 = vsyncadd [#allocation3], %s22
      %s24 = sshll.u32 [#allocation2], 4
      %s25 = int_to_ptr.vmem [resolvable:$true] %s24
      %30 = dma.hbm_to_vmem [thread:$0]  %s0, 256, %s25, [#allocation3], 128, 128, 8
    $region5: #{tpu_custom_call.1} parent=1 // pred_fallthru
      _
    // Predicated region
    $region6: #{tpu_custom_call.1} parent=1 // pred_check
      _
    $region7: #{tpu_custom_call.1} parent=1 // pred_check_branch
      %32 = sbr.rel (0) target = $region9
    $region8: #{tpu_custom_call.1} parent=1 // pred_region
      %s34 = ssub.s32 6400, 6400
      %35 = vsyncadd [#allocation6], %s34
      %s36 = sshll.u32 [#allocation5], 4
      %s37 = int_to_ptr.vmem [resolvable:$true] %s36
      %42 = dma.hbm_to_vmem [thread:$0]  %s1, 6400, %s37, [#allocation6], 1280, 1280, 80
    $region9: #{tpu_custom_call.1} parent=1 // pred_fallthru
      _
    // Predicated region
    $region10: #{tpu_custom_call.1} parent=1 // pred_check
      _
    $region11: #{tpu_custom_call.1} parent=1 // pred_check_branch
      %44 = sbr.rel (0) target = $region13
    $region12: #{tpu_custom_call.1} parent=1 // pred_region
      %45 = dma.done [#allocation3], 256
    $region13: #{tpu_custom_call.1} parent=1 // pred_fallthru
      _
    // Predicated region
    $region14: #{tpu_custom_call.1} parent=1 // pred_check
      _
    $region15: #{tpu_custom_call.1} parent=1 // pred_check_branch
      %47 = sbr.rel (0) target = $region17
    $region16: #{tpu_custom_call.1} parent=1 // pred_region
      %48 = dma.done [#allocation6], 6400
    $region17: #{tpu_custom_call.1} parent=1 // pred_fallthru
      _
    %v49 = vld [vmem:[#allocation2] sm:$0xff]
    %v50 = vld [vmem:[#allocation2 + $0x8] sm:$0xff]
    %v51 = vld [vmem:[#allocation5] sm:$0xff]
    %v52 = vld [vmem:[#allocation5 + $0x50] sm:$0xff]
    %v53 = vld [vmem:[#allocation5 + $0xa0] sm:$0xff]
    %v54 = vld [vmem:[#allocation5 + $0xf0] sm:$0xff]
    %v55 = vld [vmem:[#allocation5 + $0x140] sm:$0x1f]
    %vm56 = vcmask 302080
    %v58 = vsel %vm56, %v49, 0
    %v61 = vsel %vm56, %v50, 0
    %vm63 = vcmask 1044480
    %v65 = vsel %vm63, %v55, 0
    %67 = vmatprep.subr.mxu0 0.0
    %68 = vmatpush1.msra.mxu0 %v51
    %69 = vmatprep.subr.mxu0 0.0
    %70 = vmatpush1.msra.mxu0 %v52
    %71 = vmatprep.subr.mxu0 0.0
    %72 = vmatpush1.msra.mxu0 %v53
    %73 = vmatprep.subr.mxu0 0.0
    %74 = vmatpush1.msra.mxu0 %v54
    %75 = vmatprep.subr.mxu0 0.0
    %76 = vmatpush1.msra.mxu0 %v65
    %77 = vmatprep.subr.mxu0 0.0
    %78 = vmatpush1.msra.mxu0 0.0
    %79 = vmatprep.subr.mxu0 0.0
    %80 = vmatpush1.msra.mxu0 0.0
    %81 = vmatprep.subr.mxu0 0.0
    %82 = vmatpush1.msra.mxu0 0.0
    %83 = vmatprep.subr.mxu0 0.0
    %84 = vmatpush1.msra.mxu0 0.0
    %85 = vmatprep.subr.mxu0 0.0
    %86 = vmatpush1.msra.mxu0 0.0
    %87 = vmatprep.subr.mxu0 0.0
    %88 = vmatpush1.msra.mxu0 0.0
    %89 = vmatprep.subr.mxu0 0.0
    %90 = vmatpush1.msra.mxu0 0.0
    %91 = vmatprep.subr.mxu0 0.0
    %92 = vmatpush1.msra.mxu0 0.0
    %93 = vmatprep.subr.mxu0 0.0
    %94 = vmatpush1.msra.mxu0 0.0
    %95 = vmatprep.subr.mxu0 0.0
    %96 = vmatpush1.msra.mxu0 0.0
    %97 = vmatprep.subr.mxu0 0.0
    %98 = vmatpush1.msra.mxu0 0.0
    %99 = vmatprep.subr.mxu0 0.0
    %100 = vmatpush1.msra.mxu0 0.0
    %101 = vmatprep.subr.mxu0 0.0
    %102 = vmatpush1.msra.mxu0 0.0
    %103 = vmatprep.subr.mxu0 0.0
    %104 = vmatpush1.msra.mxu0 0.0
    %105 = vmatprep.subr.mxu0 0.0
    %106 = vmatpush1.msra.mxu0 0.0
    %107 = vmatprep.subr.mxu0 0.0
    %108 = vmatpush1.msra.mxu0 0.0
    %109 = vmatprep.subr.mxu0 0.0
    %110 = vmatpush1.msra.mxu0 0.0
    %111 = vmatprep.subr.mxu0 0.0
    %112 = vmatpush1.msra.mxu0 0.0
    %113 = vmatprep.subr.mxu0 0.0
    %114 = vmatpush1.msra.mxu0 0.0
    %115 = vmatprep.subr.mxu0 0.0
    %116 = vmatpush1.msra.mxu0 0.0
    %117 = vmatprep.subr.mxu0 0.0
    %118 = vmatpush1.msra.mxu0 0.0
    %119 = vmatprep.subr.mxu0 0.0
    %120 = vmatpush1.msra.mxu0 0.0
    %121 = vmatprep.subr.mxu0 0.0
    %122 = vmatpush1.msra.mxu0 0.0
    %123 = vmatprep.subr.mxu0 0.0
    %124 = vmatpush1.msra.mxu0 0.0
    %125 = vmatprep.subr.mxu0 0.0
    %126 = vmatpush1.msra.mxu0 0.0
    %127 = vmatprep.subr.mxu0 0.0
    %128 = vmatpush1.msra.mxu0 0.0
    %129 = vmatprep.subr.mxu0 0.0
    %130 = vmatpush1.msra.mxu0 0.0
    %131 = vmatprep.mubr.f32.mxu0 0.0
    %132 = vmatmul.mubr.f32.gmra.mrb[0].mxu0 %v58
    %v133 = vpop.f32.mrb[0].mxu0
    %v134 = vadd.f32 0.0, %v133
    %v135 = vpop.f32.mrb[0].mxu0
    %136 = vmatprep.mubr.f32.mxu0 0.0
    %137 = vmatmul.mubr.f32.gmra.mrb[0].mxu0 %v61
    %v138 = vpop.f32.mrb[0].mxu0
    %v139 = vadd.f32 0.0, %v138
    %v140 = vpop.f32.mrb[0].mxu0
    %141 = vdwg.mxu0
    %v142 = vmul.f32 %v134, 0.01
    %v143 = vmul.f32 %v139, 0.01
    %v144 = vmax.f32 %v134, %v142
    %v145 = vmax.f32 %v139, %v143
    %146 = vst [vmem:[#allocation7] sm:$0xff] %v144
    %147 = vst [vmem:[#allocation7 + $0x8] sm:$0xff] %v145
    %v148 = vld [vmem:[#allocation5 + $0x8] sm:$0xff]
    %v149 = vld [vmem:[#allocation5 + $0x58] sm:$0xff]
    %v150 = vld [vmem:[#allocation5 + $0xa8] sm:$0xff]
    %v151 = vld [vmem:[#allocation5 + $0xf8] sm:$0xff]
    %v152 = vld [vmem:[#allocation5 + $0x148] sm:$0x1f]
    %v154 = vsel %vm63, %v152, 0
    %156 = vmatprep.subr.mxu0 0.0
    %157 = vmatpush1.msra.mxu0 %v148
    %158 = vmatprep.subr.mxu0 0.0
    %159 = vmatpush1.msra.mxu0 %v149
    %160 = vmatprep.subr.mxu0 0.0
    %161 = vmatpush1.msra.mxu0 %v150
    %162 = vmatprep.subr.mxu0 0.0
    %163 = vmatpush1.msra.mxu0 %v151
    %164 = vmatprep.subr.mxu0 0.0
    %165 = vmatpush1.msra.mxu0 %v154
    %166 = vmatprep.subr.mxu0 0.0
    %167 = vmatpush1.msra.mxu0 0.0
    %168 = vmatprep.subr.mxu0 0.0
    %169 = vmatpush1.msra.mxu0 0.0
    %170 = vmatprep.subr.mxu0 0.0
    %171 = vmatpush1.msra.mxu0 0.0
    %172 = vmatprep.subr.mxu0 0.0
    %173 = vmatpush1.msra.mxu0 0.0
    %174 = vmatprep.subr.mxu0 0.0
    %175 = vmatpush1.msra.mxu0 0.0
    %176 = vmatprep.subr.mxu0 0.0
    %177 = vmatpush1.msra.mxu0 0.0
    %178 = vmatprep.subr.mxu0 0.0
    %179 = vmatpush1.msra.mxu0 0.0
    %180 = vmatprep.subr.mxu0 0.0
    %181 = vmatpush1.msra.mxu0 0.0
    %182 = vmatprep.subr.mxu0 0.0
    %183 = vmatpush1.msra.mxu0 0.0
    %184 = vmatprep.subr.mxu0 0.0
    %185 = vmatpush1.msra.mxu0 0.0
    %186 = vmatprep.subr.mxu0 0.0
    %187 = vmatpush1.msra.mxu0 0.0
    %188 = vmatprep.subr.mxu0 0.0
    %189 = vmatpush1.msra.mxu0 0.0
    %190 = vmatprep.subr.mxu0 0.0
    %191 = vmatpush1.msra.mxu0 0.0
    %192 = vmatprep.subr.mxu0 0.0
    %193 = vmatpush1.msra.mxu0 0.0
    %194 = vmatprep.subr.mxu0 0.0
    %195 = vmatpush1.msra.mxu0 0.0
    %196 = vmatprep.subr.mxu0 0.0
    %197 = vmatpush1.msra.mxu0 0.0
    %198 = vmatprep.subr.mxu0 0.0
    %199 = vmatpush1.msra.mxu0 0.0
    %200 = vmatprep.subr.mxu0 0.0
    %201 = vmatpush1.msra.mxu0 0.0
    %202 = vmatprep.subr.mxu0 0.0
    %203 = vmatpush1.msra.mxu0 0.0
    %204 = vmatprep.subr.mxu0 0.0
    %205 = vmatpush1.msra.mxu0 0.0
    %206 = vmatprep.subr.mxu0 0.0
    %207 = vmatpush1.msra.mxu0 0.0
    %208 = vmatprep.subr.mxu0 0.0
    %209 = vmatpush1.msra.mxu0 0.0
    %210 = vmatprep.subr.mxu0 0.0
    %211 = vmatpush1.msra.mxu0 0.0
    %212 = vmatprep.subr.mxu0 0.0
    %213 = vmatpush1.msra.mxu0 0.0
    %214 = vmatprep.subr.mxu0 0.0
    %215 = vmatpush1.msra.mxu0 0.0
    %216 = vmatprep.subr.mxu0 0.0
    %217 = vmatpush1.msra.mxu0 0.0
    %218 = vmatprep.subr.mxu0 0.0
    %219 = vmatpush1.msra.mxu0 0.0
    %220 = vmatprep.mubr.f32.mxu0 0.0
    %221 = vmatmul.mubr.f32.gmra.mrb[0].mxu0 %v58
    %v222 = vpop.f32.mrb[0].mxu0
    %v223 = vadd.f32 0.0, %v222
    %v224 = vpop.f32.mrb[0].mxu0
    %225 = vmatprep.mubr.f32.mxu0 0.0
    %226 = vmatmul.mubr.f32.gmra.mrb[0].mxu0 %v61
    %v227 = vpop.f32.mrb[0].mxu0
    %v228 = vadd.f32 0.0, %v227
    %v229 = vpop.f32.mrb[0].mxu0
    %230 = vdwg.mxu0
    %v231 = vmul.f32 %v223, 0.01
    %v232 = vmul.f32 %v228, 0.01
    %v233 = vmax.f32 %v223, %v231
    %v234 = vmax.f32 %v228, %v232
    %235 = vst [vmem:[#allocation8] sm:$0xff] %v233
    %236 = vst [vmem:[#allocation8 + $0x8] sm:$0xff] %v234
    %v237 = vld [vmem:[#allocation5 + $0x10] sm:$0xff]
    %v238 = vld [vmem:[#allocation5 + $0x18] sm:$0xff]
    %v239 = vld [vmem:[#allocation5 + $0x20] sm:$0xff]
    %v240 = vld [vmem:[#allocation5 + $0x60] sm:$0xff]
    %v241 = vld [vmem:[#allocation5 + $0x68] sm:$0xff]
    %v242 = vld [vmem:[#allocation5 + $0x70] sm:$0xff]
    %v243 = vld [vmem:[#allocation5 + $0xb0] sm:$0xff]
    %v244 = vld [vmem:[#allocation5 + $0xb8] sm:$0xff]
    %v245 = vld [vmem:[#allocation5 + $0xc0] sm:$0xff]
    %v246 = vld [vmem:[#allocation5 + $0x100] sm:$0xff]
    %v247 = vld [vmem:[#allocation5 + $0x108] sm:$0xff]
    %v248 = vld [vmem:[#allocation5 + $0x110] sm:$0xff]
    %v249 = vld [vmem:[#allocation5 + $0x150] sm:$0x1f]
    %v250 = vld [vmem:[#allocation5 + $0x158] sm:$0x1f]
    %v251 = vld [vmem:[#allocation5 + $0x160] sm:$0x1f]
    %v253 = vsel %vm63, %v249, 0
    %v256 = vsel %vm63, %v250, 0
    %v259 = vsel %vm63, %v251, 0
    %261 = vmatprep.subr.mxu0 %v238
    %262 = vmatpush1.msra.mxu0 %v237
    %263 = vmatprep.subr.mxu0 %v241
    %264 = vmatpush1.msra.mxu0 %v240
    %265 = vmatprep.subr.mxu0 %v244
    %266 = vmatpush1.msra.mxu0 %v243
    %267 = vmatprep.subr.mxu0 %v247
    %268 = vmatpush1.msra.mxu0 %v246
    %269 = vmatprep.subr.mxu0 %v256
    %270 = vmatpush1.msra.mxu0 %v253
    %271 = vmatprep.subr.mxu0 0.0
    %272 = vmatpush1.msra.mxu0 0.0
    %273 = vmatprep.subr.mxu0 0.0
    %274 = vmatpush1.msra.mxu0 0.0
    %275 = vmatprep.subr.mxu0 0.0
    %276 = vmatpush1.msra.mxu0 0.0
    %277 = vmatprep.subr.mxu0 0.0
    %278 = vmatpush1.msra.mxu0 0.0
    %279 = vmatprep.subr.mxu0 0.0
    %280 = vmatpush1.msra.mxu0 0.0
    %281 = vmatprep.subr.mxu0 0.0
    %282 = vmatpush1.msra.mxu0 0.0
    %283 = vmatprep.subr.mxu0 0.0
    %284 = vmatpush1.msra.mxu0 0.0
    %285 = vmatprep.subr.mxu0 0.0
    %286 = vmatpush1.msra.mxu0 0.0
    %287 = vmatprep.subr.mxu0 0.0
    %288 = vmatpush1.msra.mxu0 0.0
    %289 = vmatprep.subr.mxu0 0.0
    %290 = vmatpush1.msra.mxu0 0.0
    %291 = vmatprep.subr.mxu0 0.0
    %292 = vmatpush1.msra.mxu0 0.0
    %293 = vmatprep.subr.mxu0 0.0
    %294 = vmatpush1.msra.mxu0 0.0
    %295 = vmatprep.subr.mxu0 0.0
    %296 = vmatpush1.msra.mxu0 0.0
    %297 = vmatprep.subr.mxu0 0.0
    %298 = vmatpush1.msra.mxu0 0.0
    %299 = vmatprep.subr.mxu0 0.0
    %300 = vmatpush1.msra.mxu0 0.0
    %301 = vmatprep.subr.mxu0 0.0
    %302 = vmatpush1.msra.mxu0 0.0
    %303 = vmatprep.subr.mxu0 0.0
    %304 = vmatpush1.msra.mxu0 0.0
    %305 = vmatprep.subr.mxu0 0.0
    %306 = vmatpush1.msra.mxu0 0.0
    %307 = vmatprep.subr.mxu0 0.0
    %308 = vmatpush1.msra.mxu0 0.0
    %309 = vmatprep.subr.mxu0 0.0
    %310 = vmatpush1.msra.mxu0 0.0
    %311 = vmatprep.subr.mxu0 0.0
    %312 = vmatpush1.msra.mxu0 0.0
    %313 = vmatprep.subr.mxu0 0.0
    %314 = vmatpush1.msra.mxu0 0.0
    %315 = vmatprep.subr.mxu0 0.0
    %316 = vmatpush1.msra.mxu0 0.0
    %317 = vmatprep.subr.mxu0 0.0
    %318 = vmatpush1.msra.mxu0 0.0
    %319 = vmatprep.subr.mxu0 0.0
    %320 = vmatpush1.msra.mxu0 0.0
    %321 = vmatprep.subr.mxu0 0.0
    %322 = vmatpush1.msra.mxu0 0.0
    %323 = vmatprep.subr.mxu0 0.0
    %324 = vmatpush1.msra.mxu0 0.0
    %325 = vmatprep.mubr.f32.mxu0 0.0
    %326 = vmatmul.mubr.f32.gmra.mrb[0].mxu0 %v58
    %v327 = vpop.f32.mrb[0].mxu0
    %v328 = vadd.f32 0.0, %v327
    %v329 = vpop.f32.mrb[0].mxu0
    %v330 = vadd.f32 0.0, %v329
    %331 = vmatprep.mubr.f32.mxu0 0.0
    %332 = vmatmul.mubr.f32.gmra.mrb[0].mxu0 %v61
    %v333 = vpop.f32.mrb[0].mxu0
    %v334 = vadd.f32 0.0, %v333
    %v335 = vpop.f32.mrb[0].mxu0
    %v336 = vadd.f32 0.0, %v335
    %337 = vdwg.mxu0
    %338 = vmatprep.subr.mxu0 0.0
    %339 = vmatpush1.msra.mxu0 %v239
    %340 = vmatprep.subr.mxu0 0.0
    %341 = vmatpush1.msra.mxu0 %v242
    %342 = vmatprep.subr.mxu0 0.0
    %343 = vmatpush1.msra.mxu0 %v245
    %344 = vmatprep.subr.mxu0 0.0
    %345 = vmatpush1.msra.mxu0 %v248
    %346 = vmatprep.subr.mxu0 0.0
    %347 = vmatpush1.msra.mxu0 %v259
    %348 = vmatprep.subr.mxu0 0.0
    %349 = vmatpush1.msra.mxu0 0.0
    %350 = vmatprep.subr.mxu0 0.0
    %351 = vmatpush1.msra.mxu0 0.0
    %352 = vmatprep.subr.mxu0 0.0
    %353 = vmatpush1.msra.mxu0 0.0
    %354 = vmatprep.subr.mxu0 0.0
    %355 = vmatpush1.msra.mxu0 0.0
    %356 = vmatprep.subr.mxu0 0.0
    %357 = vmatpush1.msra.mxu0 0.0
    %358 = vmatprep.subr.mxu0 0.0
    %359 = vmatpush1.msra.mxu0 0.0
    %360 = vmatprep.subr.mxu0 0.0
    %361 = vmatpush1.msra.mxu0 0.0
    %362 = vmatprep.subr.mxu0 0.0
    %363 = vmatpush1.msra.mxu0 0.0
    %364 = vmatprep.subr.mxu0 0.0
    %365 = vmatpush1.msra.mxu0 0.0
    %366 = vmatprep.subr.mxu0 0.0
    %367 = vmatpush1.msra.mxu0 0.0
    %368 = vmatprep.subr.mxu0 0.0
    %369 = vmatpush1.msra.mxu0 0.0
    %370 = vmatprep.subr.mxu0 0.0
    %371 = vmatpush1.msra.mxu0 0.0
    %372 = vmatprep.subr.mxu0 0.0
    %373 = vmatpush1.msra.mxu0 0.0
    %374 = vmatprep.subr.mxu0 0.0
    %375 = vmatpush1.msra.mxu0 0.0
    %376 = vmatprep.subr.mxu0 0.0
    %377 = vmatpush1.msra.mxu0 0.0
    %378 = vmatprep.subr.mxu0 0.0
    %379 = vmatpush1.msra.mxu0 0.0
    %380 = vmatprep.subr.mxu0 0.0
    %381 = vmatpush1.msra.mxu0 0.0
    %382 = vmatprep.subr.mxu0 0.0
    %383 = vmatpush1.msra.mxu0 0.0
    %384 = vmatprep.subr.mxu0 0.0
    %385 = vmatpush1.msra.mxu0 0.0
    %386 = vmatprep.subr.mxu0 0.0
    %387 = vmatpush1.msra.mxu0 0.0
    %388 = vmatprep.subr.mxu0 0.0
    %389 = vmatpush1.msra.mxu0 0.0
    %390 = vmatprep.subr.mxu0 0.0
    %391 = vmatpush1.msra.mxu0 0.0
    %392 = vmatprep.subr.mxu0 0.0
    %393 = vmatpush1.msra.mxu0 0.0
    %394 = vmatprep.subr.mxu0 0.0
    %395 = vmatpush1.msra.mxu0 0.0
    %396 = vmatprep.subr.mxu0 0.0
    %397 = vmatpush1.msra.mxu0 0.0
    %398 = vmatprep.subr.mxu0 0.0
    %399 = vmatpush1.msra.mxu0 0.0
    %400 = vmatprep.subr.mxu0 0.0
    %401 = vmatpush1.msra.mxu0 0.0
    %402 = vmatprep.mubr.f32.mxu0 0.0
    %403 = vmatmul.mubr.f32.gmra.mrb[0].mxu0 %v58
    %v404 = vpop.f32.mrb[0].mxu0
    %v405 = vadd.f32 0.0, %v404
    %v406 = vpop.f32.mrb[0].mxu0
    %407 = vmatprep.mubr.f32.mxu0 0.0
    %408 = vmatmul.mubr.f32.gmra.mrb[0].mxu0 %v61
    %v409 = vpop.f32.mrb[0].mxu0
    %v410 = vadd.f32 0.0, %v409
    %v411 = vpop.f32.mrb[0].mxu0
    %412 = vdwg.mxu0
    %v413 = vmul.f32 %v328, 0.01
    %v414 = vmul.f32 %v330, 0.01
    %v415 = vmul.f32 %v405, 0.01
    %v416 = vmul.f32 %v334, 0.01
    %v417 = vmul.f32 %v336, 0.01
    %v418 = vmul.f32 %v410, 0.01
    %v419 = vmax.f32 %v328, %v413
    %v420 = vmax.f32 %v330, %v414
    %v421 = vmax.f32 %v405, %v415
    %v422 = vmax.f32 %v334, %v416
    %v423 = vmax.f32 %v336, %v417
    %v424 = vmax.f32 %v410, %v418
    %425 = vst [vmem:[#allocation10] sm:$0xff] %v419
    %426 = vst [vmem:[#allocation10 + $0x8] sm:$0xff] %v420
    %427 = vst [vmem:[#allocation10 + $0x10] sm:$0xff] %v421
    %428 = vst [vmem:[#allocation10 + $0x18] sm:$0xff] %v422
    %429 = vst [vmem:[#allocation10 + $0x20] sm:$0xff] %v423
    %430 = vst [vmem:[#allocation10 + $0x28] sm:$0xff] %v424
    %v431 = vld [vmem:[#allocation5 + $0x28] sm:$0xff]
    %v432 = vld [vmem:[#allocation5 + $0x30] sm:$0xff]
    %v433 = vld [vmem:[#allocation5 + $0x38] sm:$0xff]
    %v434 = vld [vmem:[#allocation5 + $0x78] sm:$0xff]
    %v435 = vld [vmem:[#allocation5 + $0x80] sm:$0xff]
    %v436 = vld [vmem:[#allocation5 + $0x88] sm:$0xff]
    %v437 = vld [vmem:[#allocation5 + $0xc8] sm:$0xff]
    %v438 = vld [vmem:[#allocation5 + $0xd0] sm:$0xff]
    %v439 = vld [vmem:[#allocation5 + $0xd8] sm:$0xff]
    %v440 = vld [vmem:[#allocation5 + $0x118] sm:$0xff]
    %v441 = vld [vmem:[#allocation5 + $0x120] sm:$0xff]
    %v442 = vld [vmem:[#allocation5 + $0x128] sm:$0xff]
    %v443 = vld [vmem:[#allocation5 + $0x168] sm:$0x1f]
    %v444 = vld [vmem:[#allocation5 + $0x170] sm:$0x1f]
    %v445 = vld [vmem:[#allocation5 + $0x178] sm:$0x1f]
    %v447 = vsel %vm63, %v443, 0
    %v450 = vsel %vm63, %v444, 0
    %v453 = vsel %vm63, %v445, 0
    %455 = vmatprep.subr.mxu0 %v432
    %456 = vmatpush1.msra.mxu0 %v431
    %457 = vmatprep.subr.mxu0 %v435
    %458 = vmatpush1.msra.mxu0 %v434
    %459 = vmatprep.subr.mxu0 %v438
    %460 = vmatpush1.msra.mxu0 %v437
    %461 = vmatprep.subr.mxu0 %v441
    %462 = vmatpush1.msra.mxu0 %v440
    %463 = vmatprep.subr.mxu0 %v450
    %464 = vmatpush1.msra.mxu0 %v447
    %465 = vmatprep.subr.mxu0 0.0
    %466 = vmatpush1.msra.mxu0 0.0
    %467 = vmatprep.subr.mxu0 0.0
    %468 = vmatpush1.msra.mxu0 0.0
    %469 = vmatprep.subr.mxu0 0.0
    %470 = vmatpush1.msra.mxu0 0.0
    %471 = vmatprep.subr.mxu0 0.0
    %472 = vmatpush1.msra.mxu0 0.0
    %473 = vmatprep.subr.mxu0 0.0
    %474 = vmatpush1.msra.mxu0 0.0
    %475 = vmatprep.subr.mxu0 0.0
    %476 = vmatpush1.msra.mxu0 0.0
    %477 = vmatprep.subr.mxu0 0.0
    %478 = vmatpush1.msra.mxu0 0.0
    %479 = vmatprep.subr.mxu0 0.0
    %480 = vmatpush1.msra.mxu0 0.0
    %481 = vmatprep.subr.mxu0 0.0
    %482 = vmatpush1.msra.mxu0 0.0
    %483 = vmatprep.subr.mxu0 0.0
    %484 = vmatpush1.msra.mxu0 0.0
    %485 = vmatprep.subr.mxu0 0.0
    %486 = vmatpush1.msra.mxu0 0.0
    %487 = vmatprep.subr.mxu0 0.0
    %488 = vmatpush1.msra.mxu0 0.0
    %489 = vmatprep.subr.mxu0 0.0
    %490 = vmatpush1.msra.mxu0 0.0
    %491 = vmatprep.subr.mxu0 0.0
    %492 = vmatpush1.msra.mxu0 0.0
    %493 = vmatprep.subr.mxu0 0.0
    %494 = vmatpush1.msra.mxu0 0.0
    %495 = vmatprep.subr.mxu0 0.0
    %496 = vmatpush1.msra.mxu0 0.0
    %497 = vmatprep.subr.mxu0 0.0
    %498 = vmatpush1.msra.mxu0 0.0
    %499 = vmatprep.subr.mxu0 0.0
    %500 = vmatpush1.msra.mxu0 0.0
    %501 = vmatprep.subr.mxu0 0.0
    %502 = vmatpush1.msra.mxu0 0.0
    %503 = vmatprep.subr.mxu0 0.0
    %504 = vmatpush1.msra.mxu0 0.0
    %505 = vmatprep.subr.mxu0 0.0
    %506 = vmatpush1.msra.mxu0 0.0
    %507 = vmatprep.subr.mxu0 0.0
    %508 = vmatpush1.msra.mxu0 0.0
    %509 = vmatprep.subr.mxu0 0.0
    %510 = vmatpush1.msra.mxu0 0.0
    %511 = vmatprep.subr.mxu0 0.0
    %512 = vmatpush1.msra.mxu0 0.0
    %513 = vmatprep.subr.mxu0 0.0
    %514 = vmatpush1.msra.mxu0 0.0
    %515 = vmatprep.subr.mxu0 0.0
    %516 = vmatpush1.msra.mxu0 0.0
    %517 = vmatprep.subr.mxu0 0.0
    %518 = vmatpush1.msra.mxu0 0.0
    %519 = vmatprep.mubr.f32.mxu0 0.0
    %520 = vmatmul.mubr.f32.gmra.mrb[0].mxu0 %v58
    %v521 = vpop.f32.mrb[0].mxu0
    %v522 = vadd.f32 0.0, %v521
    %v523 = vpop.f32.mrb[0].mxu0
    %v524 = vadd.f32 0.0, %v523
    %525 = vmatprep.mubr.f32.mxu0 0.0
    %526 = vmatmul.mubr.f32.gmra.mrb[0].mxu0 %v61
    %v527 = vpop.f32.mrb[0].mxu0
    %v528 = vadd.f32 0.0, %v527
    %v529 = vpop.f32.mrb[0].mxu0
    %v530 = vadd.f32 0.0, %v529
    %531 = vdwg.mxu0
    %532 = vmatprep.subr.mxu0 0.0
    %533 = vmatpush1.msra.mxu0 %v433
    %534 = vmatprep.subr.mxu0 0.0
    %535 = vmatpush1.msra.mxu0 %v436
    %536 = vmatprep.subr.mxu0 0.0
    %537 = vmatpush1.msra.mxu0 %v439
    %538 = vmatprep.subr.mxu0 0.0
    %539 = vmatpush1.msra.mxu0 %v442
    %540 = vmatprep.subr.mxu0 0.0
    %541 = vmatpush1.msra.mxu0 %v453
    %542 = vmatprep.subr.mxu0 0.0
    %543 = vmatpush1.msra.mxu0 0.0
    %544 = vmatprep.subr.mxu0 0.0
    %545 = vmatpush1.msra.mxu0 0.0
    %546 = vmatprep.subr.mxu0 0.0
    %547 = vmatpush1.msra.mxu0 0.0
    %548 = vmatprep.subr.mxu0 0.0
    %549 = vmatpush1.msra.mxu0 0.0
    %550 = vmatprep.subr.mxu0 0.0
    %551 = vmatpush1.msra.mxu0 0.0
    %552 = vmatprep.subr.mxu0 0.0
    %553 = vmatpush1.msra.mxu0 0.0
    %554 = vmatprep.subr.mxu0 0.0
    %555 = vmatpush1.msra.mxu0 0.0
    %556 = vmatprep.subr.mxu0 0.0
    %557 = vmatpush1.msra.mxu0 0.0
    %558 = vmatprep.subr.mxu0 0.0
    %559 = vmatpush1.msra.mxu0 0.0
    %560 = vmatprep.subr.mxu0 0.0
    %561 = vmatpush1.msra.mxu0 0.0
    %562 = vmatprep.subr.mxu0 0.0
    %563 = vmatpush1.msra.mxu0 0.0
    %564 = vmatprep.subr.mxu0 0.0
    %565 = vmatpush1.msra.mxu0 0.0
    %566 = vmatprep.subr.mxu0 0.0
    %567 = vmatpush1.msra.mxu0 0.0
    %568 = vmatprep.subr.mxu0 0.0
    %569 = vmatpush1.msra.mxu0 0.0
    %570 = vmatprep.subr.mxu0 0.0
    %571 = vmatpush1.msra.mxu0 0.0
    %572 = vmatprep.subr.mxu0 0.0
    %573 = vmatpush1.msra.mxu0 0.0
    %574 = vmatprep.subr.mxu0 0.0
    %575 = vmatpush1.msra.mxu0 0.0
    %576 = vmatprep.subr.mxu0 0.0
    %577 = vmatpush1.msra.mxu0 0.0
    %578 = vmatprep.subr.mxu0 0.0
    %579 = vmatpush1.msra.mxu0 0.0
    %580 = vmatprep.subr.mxu0 0.0
    %581 = vmatpush1.msra.mxu0 0.0
    %582 = vmatprep.subr.mxu0 0.0
    %583 = vmatpush1.msra.mxu0 0.0
    %584 = vmatprep.subr.mxu0 0.0
    %585 = vmatpush1.msra.mxu0 0.0
    %586 = vmatprep.subr.mxu0 0.0
    %587 = vmatpush1.msra.mxu0 0.0
    %588 = vmatprep.subr.mxu0 0.0
    %589 = vmatpush1.msra.mxu0 0.0
    %590 = vmatprep.subr.mxu0 0.0
    %591 = vmatpush1.msra.mxu0 0.0
    %592 = vmatprep.subr.mxu0 0.0
    %593 = vmatpush1.msra.mxu0 0.0
    %594 = vmatprep.subr.mxu0 0.0
    %595 = vmatpush1.msra.mxu0 0.0
    %596 = vmatprep.mubr.f32.mxu0 0.0
    %597 = vmatmul.mubr.f32.gmra.mrb[0].mxu0 %v58
    %v598 = vpop.f32.mrb[0].mxu0
    %v599 = vadd.f32 0.0, %v598
    %v600 = vpop.f32.mrb[0].mxu0
    %601 = vmatprep.mubr.f32.mxu0 0.0
    %602 = vmatmul.mubr.f32.gmra.mrb[0].mxu0 %v61
    %v603 = vpop.f32.mrb[0].mxu0
    %v604 = vadd.f32 0.0, %v603
    %v605 = vpop.f32.mrb[0].mxu0
    %606 = vdwg.mxu0
    %v607 = vmul.f32 %v522, 0.01
    %v608 = vmul.f32 %v524, 0.01
    %v609 = vmul.f32 %v599, 0.01
    %v610 = vmul.f32 %v528, 0.01
    %v611 = vmul.f32 %v530, 0.01
    %v612 = vmul.f32 %v604, 0.01
    %v613 = vmax.f32 %v522, %v607
    %v614 = vmax.f32 %v524, %v608
    %v615 = vmax.f32 %v599, %v609
    %v616 = vmax.f32 %v528, %v610
    %v617 = vmax.f32 %v530, %v611
    %v618 = vmax.f32 %v604, %v612
    %619 = vst [vmem:[#allocation11] sm:$0xff] %v613
    %620 = vst [vmem:[#allocation11 + $0x8] sm:$0xff] %v614
    %621 = vst [vmem:[#allocation11 + $0x10] sm:$0xff] %v615
    %622 = vst [vmem:[#allocation11 + $0x18] sm:$0xff] %v616
    %623 = vst [vmem:[#allocation11 + $0x20] sm:$0xff] %v617
    %624 = vst [vmem:[#allocation11 + $0x28] sm:$0xff] %v618
    %v625 = vld [vmem:[#allocation5 + $0x40] sm:$0xff]
    %v626 = vld [vmem:[#allocation5 + $0x90] sm:$0xff]
    %v627 = vld [vmem:[#allocation5 + $0xe0] sm:$0xff]
    %v628 = vld [vmem:[#allocation5 + $0x130] sm:$0xff]
    %v629 = vld [vmem:[#allocation5 + $0x180] sm:$0x1f]
    %v631 = vsel %vm63, %v629, 0
    %633 = vmatprep.subr.mxu0 0.0
    %634 = vmatpush1.msra.mxu0 %v625
    %635 = vmatprep.subr.mxu0 0.0
    %636 = vmatpush1.msra.mxu0 %v626
    %637 = vmatprep.subr.mxu0 0.0
    %638 = vmatpush1.msra.mxu0 %v627
    %639 = vmatprep.subr.mxu0 0.0
    %640 = vmatpush1.msra.mxu0 %v628
    %641 = vmatprep.subr.mxu0 0.0
    %642 = vmatpush1.msra.mxu0 %v631
    %643 = vmatprep.subr.mxu0 0.0
    %644 = vmatpush1.msra.mxu0 0.0
    %645 = vmatprep.subr.mxu0 0.0
    %646 = vmatpush1.msra.mxu0 0.0
    %647 = vmatprep.subr.mxu0 0.0
    %648 = vmatpush1.msra.mxu0 0.0
    %649 = vmatprep.subr.mxu0 0.0
    %650 = vmatpush1.msra.mxu0 0.0
    %651 = vmatprep.subr.mxu0 0.0
    %652 = vmatpush1.msra.mxu0 0.0
    %653 = vmatprep.subr.mxu0 0.0
    %654 = vmatpush1.msra.mxu0 0.0
    %655 = vmatprep.subr.mxu0 0.0
    %656 = vmatpush1.msra.mxu0 0.0
    %657 = vmatprep.subr.mxu0 0.0
    %658 = vmatpush1.msra.mxu0 0.0
    %659 = vmatprep.subr.mxu0 0.0
    %660 = vmatpush1.msra.mxu0 0.0
    %661 = vmatprep.subr.mxu0 0.0
    %662 = vmatpush1.msra.mxu0 0.0
    %663 = vmatprep.subr.mxu0 0.0
    %664 = vmatpush1.msra.mxu0 0.0
    %665 = vmatprep.subr.mxu0 0.0
    %666 = vmatpush1.msra.mxu0 0.0
    %667 = vmatprep.subr.mxu0 0.0
    %668 = vmatpush1.msra.mxu0 0.0
    %669 = vmatprep.subr.mxu0 0.0
    %670 = vmatpush1.msra.mxu0 0.0
    %671 = vmatprep.subr.mxu0 0.0
    %672 = vmatpush1.msra.mxu0 0.0
    %673 = vmatprep.subr.mxu0 0.0
    %674 = vmatpush1.msra.mxu0 0.0
    %675 = vmatprep.subr.mxu0 0.0
    %676 = vmatpush1.msra.mxu0 0.0
    %677 = vmatprep.subr.mxu0 0.0
    %678 = vmatpush1.msra.mxu0 0.0
    %679 = vmatprep.subr.mxu0 0.0
    %680 = vmatpush1.msra.mxu0 0.0
    %681 = vmatprep.subr.mxu0 0.0
    %682 = vmatpush1.msra.mxu0 0.0
    %683 = vmatprep.subr.mxu0 0.0
    %684 = vmatpush1.msra.mxu0 0.0
    %685 = vmatprep.subr.mxu0 0.0
    %686 = vmatpush1.msra.mxu0 0.0
    %687 = vmatprep.subr.mxu0 0.0
    %688 = vmatpush1.msra.mxu0 0.0
    %689 = vmatprep.subr.mxu0 0.0
    %690 = vmatpush1.msra.mxu0 0.0
    %691 = vmatprep.subr.mxu0 0.0
    %692 = vmatpush1.msra.mxu0 0.0
    %693 = vmatprep.subr.mxu0 0.0
    %694 = vmatpush1.msra.mxu0 0.0
    %695 = vmatprep.subr.mxu0 0.0
    %696 = vmatpush1.msra.mxu0 0.0
    %697 = vmatprep.mubr.f32.mxu0 0.0
    %698 = vmatmul.mubr.f32.gmra.mrb[0].mxu0 %v58
    %v699 = vpop.f32.mrb[0].mxu0
    %v700 = vadd.f32 0.0, %v699
    %v701 = vpop.f32.mrb[0].mxu0
    %702 = vmatprep.mubr.f32.mxu0 0.0
    %703 = vmatmul.mubr.f32.gmra.mrb[0].mxu0 %v61
    %v704 = vpop.f32.mrb[0].mxu0
    %v705 = vadd.f32 0.0, %v704
    %v706 = vpop.f32.mrb[0].mxu0
    %707 = vdwg.mxu0
    %v708 = vmul.f32 %v700, 0.01
    %v709 = vmul.f32 %v705, 0.01
    %v710 = vmax.f32 %v700, %v708
    %v711 = vmax.f32 %v705, %v709
    %712 = vst [vmem:[#allocation13] sm:$0xff] %v710
    %713 = vst [vmem:[#allocation13 + $0x8] sm:$0xff] %v711
    %v714 = vld [vmem:[#allocation5 + $0x48] sm:$0xff]
    %v715 = vld [vmem:[#allocation5 + $0x98] sm:$0xff]
    %v716 = vld [vmem:[#allocation5 + $0xe8] sm:$0xff]
    %v717 = vld [vmem:[#allocation5 + $0x138] sm:$0xff]
    %v718 = vld [vmem:[#allocation5 + $0x188] sm:$0x1f]
    %v720 = vsel %vm63, %v718, 0
    %722 = vmatprep.subr.mxu0 0.0
    %723 = vmatpush1.msra.mxu0 %v714
    %724 = vmatprep.subr.mxu0 0.0
    %725 = vmatpush1.msra.mxu0 %v715
    %726 = vmatprep.subr.mxu0 0.0
    %727 = vmatpush1.msra.mxu0 %v716
    %728 = vmatprep.subr.mxu0 0.0
    %729 = vmatpush1.msra.mxu0 %v717
    %730 = vmatprep.subr.mxu0 0.0
    %731 = vmatpush1.msra.mxu0 %v720
    %732 = vmatprep.subr.mxu0 0.0
    %733 = vmatpush1.msra.mxu0 0.0
    %734 = vmatprep.subr.mxu0 0.0
    %735 = vmatpush1.msra.mxu0 0.0
    %736 = vmatprep.subr.mxu0 0.0
    %737 = vmatpush1.msra.mxu0 0.0
    %738 = vmatprep.subr.mxu0 0.0
    %739 = vmatpush1.msra.mxu0 0.0
    %740 = vmatprep.subr.mxu0 0.0
    %741 = vmatpush1.msra.mxu0 0.0
    %742 = vmatprep.subr.mxu0 0.0
    %743 = vmatpush1.msra.mxu0 0.0
    %744 = vmatprep.subr.mxu0 0.0
    %745 = vmatpush1.msra.mxu0 0.0
    %746 = vmatprep.subr.mxu0 0.0
    %747 = vmatpush1.msra.mxu0 0.0
    %748 = vmatprep.subr.mxu0 0.0
    %749 = vmatpush1.msra.mxu0 0.0
    %750 = vmatprep.subr.mxu0 0.0
    %751 = vmatpush1.msra.mxu0 0.0
    %752 = vmatprep.subr.mxu0 0.0
    %753 = vmatpush1.msra.mxu0 0.0
    %754 = vmatprep.subr.mxu0 0.0
    %755 = vmatpush1.msra.mxu0 0.0
    %756 = vmatprep.subr.mxu0 0.0
    %757 = vmatpush1.msra.mxu0 0.0
    %758 = vmatprep.subr.mxu0 0.0
    %759 = vmatpush1.msra.mxu0 0.0
    %760 = vmatprep.subr.mxu0 0.0
    %761 = vmatpush1.msra.mxu0 0.0
    %762 = vmatprep.subr.mxu0 0.0
    %763 = vmatpush1.msra.mxu0 0.0
    %764 = vmatprep.subr.mxu0 0.0
    %765 = vmatpush1.msra.mxu0 0.0
    %766 = vmatprep.subr.mxu0 0.0
    %767 = vmatpush1.msra.mxu0 0.0
    %768 = vmatprep.subr.mxu0 0.0
    %769 = vmatpush1.msra.mxu0 0.0
    %770 = vmatprep.subr.mxu0 0.0
    %771 = vmatpush1.msra.mxu0 0.0
    %772 = vmatprep.subr.mxu0 0.0
    %773 = vmatpush1.msra.mxu0 0.0
    %774 = vmatprep.subr.mxu0 0.0
    %775 = vmatpush1.msra.mxu0 0.0
    %776 = vmatprep.subr.mxu0 0.0
    %777 = vmatpush1.msra.mxu0 0.0
    %778 = vmatprep.subr.mxu0 0.0
    %779 = vmatpush1.msra.mxu0 0.0
    %780 = vmatprep.subr.mxu0 0.0
    %781 = vmatpush1.msra.mxu0 0.0
    %782 = vmatprep.subr.mxu0 0.0
    %783 = vmatpush1.msra.mxu0 0.0
    %784 = vmatprep.subr.mxu0 0.0
    %785 = vmatpush1.msra.mxu0 0.0
    %786 = vmatprep.mubr.f32.mxu0 0.0
    %787 = vmatmul.mubr.f32.gmra.mrb[0].mxu0 %v58
    %v788 = vpop.f32.mrb[0].mxu0
    %v789 = vadd.f32 0.0, %v788
    %v790 = vpop.f32.mrb[0].mxu0
    %791 = vmatprep.mubr.f32.mxu0 0.0
    %792 = vmatmul.mubr.f32.gmra.mrb[0].mxu0 %v61
    %v793 = vpop.f32.mrb[0].mxu0
    %v794 = vadd.f32 0.0, %v793
    %v795 = vpop.f32.mrb[0].mxu0
    %796 = vdwg.mxu0
    %v797 = vmul.f32 %v789, 0.01
    %v798 = vmul.f32 %v794, 0.01
    %v799 = vmax.f32 %v789, %v797
    %v800 = vmax.f32 %v794, %v798
    %801 = vst [vmem:[#allocation14] sm:$0xff] %v799
    %802 = vst [vmem:[#allocation14 + $0x8] sm:$0xff] %v800
    // Predicated region
    $region18: #{tpu_custom_call.1} parent=1 // pred_check
      _
    $region19: #{tpu_custom_call.1} parent=1 // pred_check_branch
      %804 = sbr.rel (0) target = $region21
    $region20: #{tpu_custom_call.1} parent=1 // pred_region
      %s806 = ssub.s32 256, 256
      %807 = vsyncadd [#allocation4], %s806
      %s808 = sshll.u32 [#allocation7], 4
      %s809 = int_to_ptr.vmem [resolvable:$true] %s808
      %814 = dma.vmem_to_hbm [thread:$0]  %s809, 256, %s2, [#allocation4], 128, 128, 8
    $region21: #{tpu_custom_call.1} parent=1 // pred_fallthru
      _
    // Predicated region
    $region22: #{tpu_custom_call.1} parent=1 // pred_check
      _
    $region23: #{tpu_custom_call.1} parent=1 // pred_check_branch
      %816 = sbr.rel (0) target = $region25
    $region24: #{tpu_custom_call.1} parent=1 // pred_region
      %s818 = ssub.s32 256, 256
      %819 = vsyncadd [#allocation9], %s818
      %s820 = sshll.u32 [#allocation8], 4
      %s821 = int_to_ptr.vmem [resolvable:$true] %s820
      %826 = dma.vmem_to_hbm [thread:$0]  %s821, 256, %s3, [#allocation9], 128, 128, 8
    $region25: #{tpu_custom_call.1} parent=1 // pred_fallthru
      _
    // Predicated region
    $region26: #{tpu_custom_call.1} parent=1 // pred_check
      _
    $region27: #{tpu_custom_call.1} parent=1 // pred_check_branch
      %828 = sbr.rel (0) target = $region29
    $region28: #{tpu_custom_call.1} parent=1 // pred_region
      %s830 = ssub.s32 768, 768
      %831 = vsyncadd [#allocation9], %s830
      %s832 = sshll.u32 [#allocation10], 4
      %s833 = int_to_ptr.vmem [resolvable:$true] %s832
      %838 = dma.vmem_to_hbm [thread:$0]  %s833, 768, %s4, [#allocation9], 384, 384, 24
    $region29: #{tpu_custom_call.1} parent=1 // pred_fallthru
      _
    // Predicated region
    $region30: #{tpu_custom_call.1} parent=1 // pred_check
      _
    $region31: #{tpu_custom_call.1} parent=1 // pred_check_branch
      %840 = sbr.rel (0) target = $region33
    $region32: #{tpu_custom_call.1} parent=1 // pred_region
      %s842 = ssub.s32 768, 768
      %843 = vsyncadd [#allocation12], %s842
      %s844 = sshll.u32 [#allocation11], 4
      %s845 = int_to_ptr.vmem [resolvable:$true] %s844
      %850 = dma.vmem_to_hbm [thread:$0]  %s845, 768, %s5, [#allocation12], 384, 384, 24
    $region33: #{tpu_custom_call.1} parent=1 // pred_fallthru
      _
    // Predicated region
    $region34: #{tpu_custom_call.1} parent=1 // pred_check
      _
    $region35: #{tpu_custom_call.1} parent=1 // pred_check_branch
      %852 = sbr.rel (0) target = $region37
    $region36: #{tpu_custom_call.1} parent=1 // pred_region
      %s854 = ssub.s32 256, 256
      %855 = vsyncadd [#allocation12], %s854
      %s856 = sshll.u32 [#allocation13], 4
      %s857 = int_to_ptr.vmem [resolvable:$true] %s856
      %862 = dma.vmem_to_hbm [thread:$0]  %s857, 256, %s6, [#allocation12], 128, 128, 8
    $region37: #{tpu_custom_call.1} parent=1 // pred_fallthru
      _
    // Predicated region
    $region38: #{tpu_custom_call.1} parent=1 // pred_check
      _
    $region39: #{tpu_custom_call.1} parent=1 // pred_check_branch
      %864 = sbr.rel (0) target = $region41
    $region40: #{tpu_custom_call.1} parent=1 // pred_region
      %s866 = ssub.s32 256, 256
      %867 = vsyncadd [#allocation15], %s866
      %s868 = sshll.u32 [#allocation14], 4
      %s869 = int_to_ptr.vmem [resolvable:$true] %s868
      %874 = dma.vmem_to_hbm [thread:$0]  %s869, 256, %s7, [#allocation15], 128, 128, 8
    $region41: #{tpu_custom_call.1} parent=1 // pred_fallthru
      _
    // Predicated region
    $region42: #{tpu_custom_call.1} parent=1 // pred_check
      _
    $region43: #{tpu_custom_call.1} parent=1 // pred_check_branch
      %876 = sbr.rel (0) target = $region45
    $region44: #{tpu_custom_call.1} parent=1 // pred_region
      %877 = dma.done [#allocation4], 256
    $region45: #{tpu_custom_call.1} parent=1 // pred_fallthru
      _
    // Predicated region
    $region46: #{tpu_custom_call.1} parent=1 // pred_check
      _
    $region47: #{tpu_custom_call.1} parent=1 // pred_check_branch
      %879 = sbr.rel (0) target = $region49
    $region48: #{tpu_custom_call.1} parent=1 // pred_region
      %880 = dma.done [#allocation9], 256
    $region49: #{tpu_custom_call.1} parent=1 // pred_fallthru
      _
    // Predicated region
    $region50: #{tpu_custom_call.1} parent=1 // pred_check
      _
    $region51: #{tpu_custom_call.1} parent=1 // pred_check_branch
      %882 = sbr.rel (0) target = $region53
    $region52: #{tpu_custom_call.1} parent=1 // pred_region
      %883 = dma.done [#allocation9], 768
    $region53: #{tpu_custom_call.1} parent=1 // pred_fallthru
      _
    // Predicated region
    $region54: #{tpu_custom_call.1} parent=1 // pred_check
      _
    $region55: #{tpu_custom_call.1} parent=1 // pred_check_branch
      %885 = sbr.rel (0) target = $region57
    $region56: #{tpu_custom_call.1} parent=1 // pred_region
      %886 = dma.done [#allocation12], 768
    $region57: #{tpu_custom_call.1} parent=1 // pred_fallthru
      _
    // Predicated region
    $region58: #{tpu_custom_call.1} parent=1 // pred_check
      _
    $region59: #{tpu_custom_call.1} parent=1 // pred_check_branch
      %888 = sbr.rel (0) target = $region61
    $region60: #{tpu_custom_call.1} parent=1 // pred_region
      %889 = dma.done [#allocation12], 256
    $region61: #{tpu_custom_call.1} parent=1 // pred_fallthru
      _
    // Predicated region
    $region62: #{tpu_custom_call.1} parent=1 // pred_check
      _
    $region63: #{tpu_custom_call.1} parent=1 // pred_check_branch
      %891 = sbr.rel (0) target = $region65
    $region64: #{tpu_custom_call.1} parent=1 // pred_region
      %892 = dma.done [#allocation15], 256
    $region65: #{tpu_custom_call.1} parent=1 // pred_fallthru
      _
    %893 = vsyncpa [#allocation3], 1
    %894 = vsyncpa [#allocation6], 1
    %895 = vsyncpa [#allocation4], 1
    %896 = vsyncpa [#allocation9], 1
    %897 = vsyncpa [#allocation12], 1
    %898 = vsyncpa [#allocation15], 1

</llo_original>
